<compile_context>
chip_gen: v7x
topology: tpu7x:2x2x1
jax: 0.10.0
libtpu: 0.0.40
codegen_flags: <defaults>
</compile_context>

<pallas_src>
import jax
import jax.numpy as jnp
from jax.experimental import pallas as pl
from jax.experimental.pallas import tpu as pltpu


def mlp_kernel(x_ref, w1_ref, b1_ref, w2_ref, b2_ref, o_ref):
    # x:  (TB, F)                F = winsize*3
    # w1: (F, H)    b1: (1, H)
    # w2: (1, H)    b2: (1, 1) scalar in SMEM
    # o:  (TB, 1)
    x = x_ref[...]
    # Layer 1 on the MXU, f32 accumulation regardless of input dtype.
    h = jnp.dot(x, w1_ref[...], preferred_element_type=jnp.float32)
    h = jnp.maximum(h + b1_ref[...], 0.0)                 # bias + ReLU, f32 on VPU
    # Layer 2 (H -> 1): VPU multiply + XLU lane reduction; an N=1 MXU matmul
    # would waste a full systolic pass per tile.
    b2 = b2_ref[0, 0]
    y = jnp.sum(h * w2_ref[...], axis=-1, keepdims=True) + b2
    o_ref[...] = y.astype(o_ref.dtype)


def _round_up(n, m):
    return ((n + m - 1) // m) * m


def mlp_forward(x, w1, b1, w2, b2, *, tile_b=512, use_bf16=False):
    """x: (B, winsize, 3) float -> (B, 1) float32.

    w1: (F, H), b1: (1, H), w2: (H, 1), b2: (1, 1)   (transposed torch layout).
    """
    B = x.shape[0]
    x2d = x.reshape(B, -1)                     # flatten(start_dim=1)
    F = x2d.shape[1]
    H = w1.shape[1]

    # Batch tiling: TB rows per grid step; pad batch up to a multiple of TB.
    TB = min(tile_b, _round_up(B, 8))
    B_pad = _round_up(B, TB)
    if B_pad != B:
        x2d = jnp.pad(x2d, ((0, B_pad - B), (0, 0)))
    nb = B_pad // TB

    w2_row = w2.reshape(1, H).astype(jnp.float32)   # (H,1) -> (1,H) for VPU layer 2
    b1 = b1.reshape(1, H).astype(jnp.float32)
    b2 = b2.reshape(1, 1).astype(jnp.float32)

    if use_bf16:
        # Halve HBM traffic of the big operand (x) and the MXU push; keep the
        # f32 accumulate + f32 epilogue inside the kernel.
        x2d = x2d.astype(jnp.bfloat16)
        w1 = w1.astype(jnp.bfloat16)

    out = pl.pallas_call(
        mlp_kernel,
        out_shape=jax.ShapeDtypeStruct((B_pad, 1), jnp.float32),
        grid=(nb,),
        in_specs=[
            pl.BlockSpec((TB, F), lambda i: (i, 0)),             # x tile (streamed)
            pl.BlockSpec((F, H), lambda i: (0, 0)),              # w1 (resident)
            pl.BlockSpec((1, H), lambda i: (0, 0)),              # b1 (resident)
            pl.BlockSpec((1, H), lambda i: (0, 0)),              # w2 row (resident)
            pl.BlockSpec(memory_space=pltpu.MemorySpace.SMEM),   # b2 scalar
        ],
        out_specs=pl.BlockSpec((TB, 1), lambda i: (i, 0)),
        compiler_params=pltpu.CompilerParams(
            dimension_semantics=("parallel",),
        ),
    )(x2d, w1, b1, w2_row, b2)

    return out[:B]


def init_params(key, winsize, n_hl):
    """Deterministic init mimicking torch.nn.Linear default (uniform +-1/sqrt(fan_in))."""
    in_f = winsize * 3
    k1, k2, k3, k4 = jax.random.split(key, 4)
    lim1 = 1.0 / jnp.sqrt(in_f)
    lim2 = 1.0 / jnp.sqrt(n_hl)
    # stored as (in_features, out_features) == transpose of torch layout
    w1 = jax.random.uniform(k1, (in_f, n_hl), jnp.float32, -lim1, lim1)
    b1 = jax.random.uniform(k2, (1, n_hl), jnp.float32, -lim1, lim1)
    w2 = jax.random.uniform(k3, (n_hl, 1), jnp.float32, -lim2, lim2)
    b2 = jax.random.uniform(k4, (1, 1), jnp.float32, -lim2, lim2)
    return w1, b1, w2, b2


if __name__ == "__main__":
    winsize = 8          # -> in_features F = 24
    n_hl = 32
    batch = 1200         # not a multiple of TB=512 -> exercises padding + 3 grid steps

    key = jax.random.PRNGKey(0)
    kx, kp = jax.random.split(key)
    x = jax.random.normal(kx, (batch, winsize, 3), jnp.float32)
    w1, b1, w2, b2 = init_params(kp, winsize, n_hl)

    # f32 path
    out = jax.block_until_ready(mlp_forward(x, w1, b1, w2, b2))

    # reference in plain JAX
    x2d = x.reshape(batch, -1)
    ref_h = jnp.maximum(x2d @ w1 + b1, 0.0)
    ref = ref_h @ w2 + b2

    assert out.shape == (batch, 1)
    assert jnp.allclose(out, ref, atol=1e-4, rtol=1e-4)

    # bf16-input path (x, w1 in bf16; f32 accumulate + f32 epilogue), loose check
    out_bf16 = jax.block_until_ready(mlp_forward(x, w1, b1, w2, b2, use_bf16=True))
    assert out_bf16.shape == (batch, 1)
    assert jnp.allclose(out_bf16, ref, atol=5e-2, rtol=5e-2)

    print("KERNEL_OK")
</pallas_src>

<mosaic_0001>
module attributes {stable_mosaic.version = 11 : i64} {
  func.func @mlp_kernel(%arg0: i32, %arg1: memref<512x24xf32, #tpu.memory_space<vmem>>, %arg2: memref<24x32xf32, #tpu.memory_space<vmem>>, %arg3: memref<1x32xf32, #tpu.memory_space<vmem>>, %arg4: memref<1x32xf32, #tpu.memory_space<vmem>>, %arg5: memref<1x1xf32, #tpu.memory_space<smem>>, %arg6: memref<512x1xf32, #tpu.memory_space<vmem>>) attributes {dimension_semantics = [#tpu.dimension_semantics<parallel>], iteration_bounds = array<i64: 3>, scalar_prefetch = 0 : i64, scratch_operands = 0 : i64, tpu.core_type = #tpu.core_type<tc>, window_params = [{transform_indices = @transform_0, window_bounds = array<i64: 512, 24>}, {pipeline_mode = #tpu.pipeline_mode<synchronous>, transform_indices = @transform_1, window_bounds = array<i64: 24, 32>}, {pipeline_mode = #tpu.pipeline_mode<synchronous>, transform_indices = @transform_2, window_bounds = array<i64: 1, 32>}, {pipeline_mode = #tpu.pipeline_mode<synchronous>, transform_indices = @transform_3, window_bounds = array<i64: 1, 32>}, {transform_indices = @transform_4, window_bounds = array<i64: 1, 1>}, {transform_indices = @transform_5, window_bounds = array<i64: 512, 1>}]} {
    %c0 = arith.constant 0 : index
    %c0_0 = arith.constant 0 : index
    %0 = vector.load %arg1[%c0, %c0_0] : memref<512x24xf32, #tpu.memory_space<vmem>>, vector<512x24xf32>
    %c0_1 = arith.constant 0 : index
    %c0_2 = arith.constant 0 : index
    %1 = vector.load %arg2[%c0_1, %c0_2] : memref<24x32xf32, #tpu.memory_space<vmem>>, vector<24x32xf32>
    %cst = arith.constant dense<0.000000e+00> : vector<512x32xf32>
    %2 = tpu.matmul %0, %1, %cst {dimension_numbers = #tpu.dot_dimension_numbers<[1], [0], [0], [1], [0, 0, 1, 1], [], []>} : vector<512x24xf32>, vector<24x32xf32>, vector<512x32xf32> -> vector<512x32xf32>
    %c0_3 = arith.constant 0 : index
    %c0_4 = arith.constant 0 : index
    %3 = vector.load %arg3[%c0_3, %c0_4] : memref<1x32xf32, #tpu.memory_space<vmem>>, vector<1x32xf32>
    %4 = vector.broadcast %3 : vector<1x32xf32> to vector<512x32xf32>
    %5 = arith.addf %2, %4 : vector<512x32xf32>
    %cst_5 = arith.constant 0.000000e+00 : f32
    %6 = vector.broadcast %cst_5 : f32 to vector<512x32xf32>
    %7 = arith.maximumf %5, %6 : vector<512x32xf32>
    %c0_6 = arith.constant 0 : index
    %c0_7 = arith.constant 0 : index
    %8 = memref.load %arg5[%c0_6, %c0_7] : memref<1x1xf32, #tpu.memory_space<smem>>
    %c0_8 = arith.constant 0 : index
    %c0_9 = arith.constant 0 : index
    %9 = vector.load %arg4[%c0_8, %c0_9] : memref<1x32xf32, #tpu.memory_space<vmem>>, vector<1x32xf32>
    %10 = vector.broadcast %9 : vector<1x32xf32> to vector<512x32xf32>
    %11 = arith.mulf %7, %10 : vector<512x32xf32>
    %cst_10 = arith.constant dense<0.000000e+00> : vector<512xf32>
    %12 = vector.multi_reduction <add>, %11, %cst_10 [1] : vector<512x32xf32> to vector<512xf32>
    %13 = vector.shape_cast %12 : vector<512xf32> to vector<512x1xf32>
    %14 = vector.broadcast %8 : f32 to vector<512x1xf32>
    %15 = arith.addf %13, %14 : vector<512x1xf32>
    %c0_11 = arith.constant 0 : index
    %c0_12 = arith.constant 0 : index
    %16 = vector.load %arg6[%c0_11, %c0_12] : memref<512x1xf32, #tpu.memory_space<vmem>>, vector<512x1xf32>
    tpu.vector_store %arg6[%c0_11, %c0_12], %15 {strides = array<i32>} : memref<512x1xf32, #tpu.memory_space<vmem>>, vector<512x1xf32>,
    return
  }
  func.func @transform_0(%arg0: i32) -> (i32, i32) {
    %c0_i32 = arith.constant 0 : i32
    %c0_i32_0 = arith.constant 0 : i32
    return %arg0, %c0_i32 : i32, i32
  }
  func.func @transform_1(%arg0: i32) -> (i32, i32) {
    %c0_i32 = arith.constant 0 : i32
    %c0_i32_0 = arith.constant 0 : i32
    %c0_i32_1 = arith.constant 0 : i32
    return %c0_i32, %c0_i32_0 : i32, i32
  }
  func.func @transform_2(%arg0: i32) -> (i32, i32) {
    %c0_i32 = arith.constant 0 : i32
    %c0_i32_0 = arith.constant 0 : i32
    %c0_i32_1 = arith.constant 0 : i32
    return %c0_i32, %c0_i32_0 : i32, i32
  }
  func.func @transform_3(%arg0: i32) -> (i32, i32) {
    %c0_i32 = arith.constant 0 : i32
    %c0_i32_0 = arith.constant 0 : i32
    %c0_i32_1 = arith.constant 0 : i32
    return %c0_i32, %c0_i32_0 : i32, i32
  }
  func.func @transform_4(%arg0: i32) -> (i32, i32) {
    %c0_i32 = arith.constant 0 : i32
    %c0_i32_0 = arith.constant 0 : i32
    %c0_i32_1 = arith.constant 0 : i32
    return %c0_i32, %c0_i32_0 : i32, i32
  }
  func.func @transform_5(%arg0: i32) -> (i32, i32) {
    %c0_i32 = arith.constant 0 : i32
    %c0_i32_0 = arith.constant 0 : i32
    return %arg0, %c0_i32 : i32, i32
  }
}

</mosaic_0001>

<llo_original>
// kernel: tpu_custom_call.1
$region0: #{tpu_custom_call.1}
  #allocation0 [shape = 'u32[]', space=smem, size = 0x4, offset = 0x4, fixed_abs, tag = 'smem constant byte address 0x4 - core index']
  #allocation1 [shape = 'u32[144,128]{1,0:T(1,128)}', space=vmem, size = 0x12000, scoped, tag = 'internal scratch']
  #allocation2 [shape = 'f32[1,1]{1,0:T(1,128)S(6)}', space=smem, size = 0x200, scoped, tag = 'scoped memory for tpu_custom_call.1']
  %s0 = inlined_call_operand.vmem [shape: f32[1536,24], index: 0, kind: input, shape index: {}]
  %s1 = inlined_call_operand.vmem [shape: f32[24,32], index: 1, kind: input, shape index: {}]
  %s2 = inlined_call_operand.vmem [shape: f32[1,32], index: 2, kind: input, shape index: {}]
  %s3 = inlined_call_operand.vmem [shape: f32[1,32], index: 3, kind: input, shape index: {}]
  %s4 = inlined_call_operand.<no memory space> [shape: f32[1,1], index: 4, kind: input, shape index: {}]
  %s5 = inlined_call_operand.vmem [shape: f32[1536,1], index: 5, kind: output, shape index: {}]
  %s6 = sld [smem:[#allocation0]]
  $region53: #{tpu_custom_call.1} parent=0
    _
  %s8 = ssub.s32 1, %s6
  %s9 = scalar_select 0, %s8, %s6
  %10 = sst [smem:[#allocation2]] %s4
  loop: start=0, step=1, limit=5
  $region2: #{tpu_custom_call.1} parent=0 // loop_pre_header
    _
  $region3: #{tpu_custom_call.1} parent=0 // loop_header
    %s12 = sphi 0, %s16
    %p13 = scmp.ge.s32.totalorder %s12, 5
    %s22 = sphi 0, %s24
    %s25 = sphi 0, %s22
    %s26 = sphi 0, %s25
    %s42 = sphi 0, %s26
    %s46 = sphi 0, %s46
    %s48 = sphi 0, %s46
    %s49 = sphi 0, %s48
    %s63 = sphi 0, %s49
    %s67 = sphi 0, %s67
    %s69 = sphi 0, %s67
    %s70 = sphi 0, %s69
    %s84 = sphi 0, %s70
    %s88 = sphi 0, %s88
    %s90 = sphi 0, %s88
    %s91 = sphi 0, %s90
    %s105 = sphi 0, %s91
    %s109 = sphi 0, %s109
    %s111 = sphi 0, %s109
    %s112 = sphi 0, %s111
    %s126 = sphi 0, %s112
    %s132 = sphi 0, %s134
    %s135 = sphi 0, %s132
    %s136 = sphi 0, %s135
    %s152 = sphi 0, %s136
  $region4: #{tpu_custom_call.1} parent=0 // loop_header_branch
    %15 = sbr.rel (%p13) target = $region8
  $region5: #{tpu_custom_call.1} parent=0 // loop_body
    %s17 = ssub.s32 %s12, 1
    %s18 = ssub.s32 %s12, 2
    %s19 = sadd.s32 %s12, 1
    %s20 = ssub.s32 %s12, %s19
    %p21 = scmp.eq.s32.totalorder %s20, 0
    %s23 = sadd.s32 %s22, 1
    %s24 = scalar_select %p21, %s22, %s23
    %p27 = pneg %p21
    %p28 = scmp.eq.s32.totalorder %s12, 2
    %p29 = por %p27, %p28
    %p30 = scmp.ne.s32.totalorder %s22, %s25
    %p31 = scmp.eq.s32.totalorder %s12, 0
    %p32 = por %p30, %p31
    %p33 = scmp.ne.s32.totalorder %s22, %s25
    %p34 = scmp.eq.s32.totalorder %s17, 2
    %p35 = por %p33, %p34
    %p36 = scmp.ne.s32.totalorder %s25, %s26
    %p37 = scmp.eq.s32.totalorder %s17, 0
    %p38 = por %p36, %p37
    %p39 = scmp.ne.s32.totalorder %s25, %s26
    %p40 = scmp.eq.s32.totalorder %s18, 2
    %p41 = por %p39, %p40
    %p43 = scmp.ne.s32.totalorder %s26, %s42
    %p44 = scmp.eq.s32.totalorder %s18, 0
    %p45 = por %p43, %p44
    %s47 = sadd.s32 %s46, 1
    %p50 = scmp.eq.s32.totalorder %s12, 2
    %p51 = scmp.ne.s32.totalorder %s46, %s48
    %p52 = scmp.eq.s32.totalorder %s12, 0
    %p53 = por %p51, %p52
    %p54 = scmp.ne.s32.totalorder %s46, %s48
    %p55 = scmp.eq.s32.totalorder %s17, 2
    %p56 = por %p54, %p55
    %p57 = scmp.ne.s32.totalorder %s48, %s49
    %p58 = scmp.eq.s32.totalorder %s17, 0
    %p59 = por %p57, %p58
    %p60 = scmp.ne.s32.totalorder %s48, %s49
    %p61 = scmp.eq.s32.totalorder %s18, 2
    %p62 = por %p60, %p61
    %p64 = scmp.ne.s32.totalorder %s49, %s63
    %p65 = scmp.eq.s32.totalorder %s18, 0
    %p66 = por %p64, %p65
    %s68 = sadd.s32 %s67, 1
    %p71 = scmp.eq.s32.totalorder %s12, 2
    %p72 = scmp.ne.s32.totalorder %s67, %s69
    %p73 = scmp.eq.s32.totalorder %s12, 0
    %p74 = por %p72, %p73
    %p75 = scmp.ne.s32.totalorder %s67, %s69
    %p76 = scmp.eq.s32.totalorder %s17, 2
    %p77 = por %p75, %p76
    %p78 = scmp.ne.s32.totalorder %s69, %s70
    %p79 = scmp.eq.s32.totalorder %s17, 0
    %p80 = por %p78, %p79
    %p81 = scmp.ne.s32.totalorder %s69, %s70
    %p82 = scmp.eq.s32.totalorder %s18, 2
    %p83 = por %p81, %p82
    %p85 = scmp.ne.s32.totalorder %s70, %s84
    %p86 = scmp.eq.s32.totalorder %s18, 0
    %p87 = por %p85, %p86
    %s89 = sadd.s32 %s88, 1
    %p92 = scmp.eq.s32.totalorder %s12, 2
    %p93 = scmp.ne.s32.totalorder %s88, %s90
    %p94 = scmp.eq.s32.totalorder %s12, 0
    %p95 = por %p93, %p94
    %p96 = scmp.ne.s32.totalorder %s88, %s90
    %p97 = scmp.eq.s32.totalorder %s17, 2
    %p98 = por %p96, %p97
    %p99 = scmp.ne.s32.totalorder %s90, %s91
    %p100 = scmp.eq.s32.totalorder %s17, 0
    %p101 = por %p99, %p100
    %p102 = scmp.ne.s32.totalorder %s90, %s91
    %p103 = scmp.eq.s32.totalorder %s18, 2
    %p104 = por %p102, %p103
    %p106 = scmp.ne.s32.totalorder %s91, %s105
    %p107 = scmp.eq.s32.totalorder %s18, 0
    %p108 = por %p106, %p107
    %s110 = sadd.s32 %s109, 1
    %p113 = scmp.eq.s32.totalorder %s12, 2
    %p114 = scmp.ne.s32.totalorder %s109, %s111
    %p115 = scmp.eq.s32.totalorder %s12, 0
    %p116 = por %p114, %p115
    %p117 = scmp.ne.s32.totalorder %s109, %s111
    %p118 = scmp.eq.s32.totalorder %s17, 2
    %p119 = por %p117, %p118
    %p120 = scmp.ne.s32.totalorder %s111, %s112
    %p121 = scmp.eq.s32.totalorder %s17, 0
    %p122 = por %p120, %p121
    %p123 = scmp.ne.s32.totalorder %s111, %s112
    %p124 = scmp.eq.s32.totalorder %s18, 2
    %p125 = por %p123, %p124
    %p127 = scmp.ne.s32.totalorder %s112, %s126
    %p128 = scmp.eq.s32.totalorder %s18, 0
    %p129 = por %p127, %p128
    %s130 = ssub.s32 %s12, %s19
    %p131 = scmp.eq.s32.totalorder %s130, 0
    %s133 = sadd.s32 %s132, 1
    %s134 = scalar_select %p131, %s132, %s133
    %p137 = pneg %p131
    %p138 = scmp.eq.s32.totalorder %s12, 2
    %p139 = por %p137, %p138
    %p140 = scmp.ne.s32.totalorder %s132, %s135
    %p141 = scmp.eq.s32.totalorder %s12, 0
    %p142 = por %p140, %p141
    %p143 = scmp.ne.s32.totalorder %s132, %s135
    %p144 = scmp.eq.s32.totalorder %s17, 2
    %p145 = por %p143, %p144
    %p146 = scmp.ne.s32.totalorder %s135, %s136
    %p147 = scmp.eq.s32.totalorder %s17, 0
    %p148 = por %p146, %p147
    %p149 = scmp.ne.s32.totalorder %s135, %s136
    %p150 = scmp.eq.s32.totalorder %s18, 2
    %p151 = por %p149, %p150
    %p153 = scmp.ne.s32.totalorder %s136, %s152
    %p154 = scmp.eq.s32.totalorder %s18, 0
    %p155 = por %p153, %p154
    %p156 = scmp.le.s32.totalorder 1, %s12
    %p157 = scmp.lt.s32.totalorder %s12, 4
    %p158 = pnand %p156, %p157
    %p159 = pneg %p158
    // Predicated region
    $region9: #{tpu_custom_call.1} parent=5 // pred_check
      _
    $region10: #{tpu_custom_call.1} parent=5 // pred_check_branch
      %161 = sbr.rel (%p158) target = $region12
    $region11: #{tpu_custom_call.1} parent=5 // pred_region
      %s162 = ssub.s32 %s12, 1
      // Predicated region
      $region13: #{tpu_custom_call.1} parent=11 // pred_check
        %p163 = pneg %p59
      $region14: #{tpu_custom_call.1} parent=11 // pred_check_branch
        %165 = sbr.rel (%p163) target = $region16
      $region15: #{tpu_custom_call.1} parent=11 // pred_region
        _
      $region16: #{tpu_custom_call.1} parent=11 // pred_fallthru
        _
      // Predicated region
      $region17: #{tpu_custom_call.1} parent=11 // pred_check
        %p166 = pneg %p80
      $region18: #{tpu_custom_call.1} parent=11 // pred_check_branch
        %168 = sbr.rel (%p166) target = $region20
      $region19: #{tpu_custom_call.1} parent=11 // pred_region
        _
      $region20: #{tpu_custom_call.1} parent=11 // pred_fallthru
        _
      // Predicated region
      $region21: #{tpu_custom_call.1} parent=11 // pred_check
        %p169 = pneg %p101
      $region22: #{tpu_custom_call.1} parent=11 // pred_check_branch
        %171 = sbr.rel (%p169) target = $region24
      $region23: #{tpu_custom_call.1} parent=11 // pred_region
        _
      $region24: #{tpu_custom_call.1} parent=11 // pred_fallthru
        _
      // Predicated region
      $region25: #{tpu_custom_call.1} parent=11 // pred_check
        %p172 = pneg %p122
      $region26: #{tpu_custom_call.1} parent=11 // pred_check_branch
        %174 = sbr.rel (%p172) target = $region28
      $region27: #{tpu_custom_call.1} parent=11 // pred_region
        _
      $region28: #{tpu_custom_call.1} parent=11 // pred_fallthru
        _
    $region12: #{tpu_custom_call.1} parent=5 // pred_fallthru
      _
    %p175 = scmp.lt.s32.totalorder %s12, 3
    // Predicated region
    $region29: #{tpu_custom_call.1} parent=5 // pred_check
      %p176 = pneg %p175
    $region30: #{tpu_custom_call.1} parent=5 // pred_check_branch
      %178 = sbr.rel (%p176) target = $region32
    $region31: #{tpu_custom_call.1} parent=5 // pred_region
      // Predicated region
      $region33: #{tpu_custom_call.1} parent=31 // pred_check
        %p179 = pneg %p32
      $region34: #{tpu_custom_call.1} parent=31 // pred_check_branch
        %181 = sbr.rel (%p179) target = $region36
      $region35: #{tpu_custom_call.1} parent=31 // pred_region
        %s182 = smul.u32 64, %s12
        %p183 = scmp.lt.s32.totalorder %s182, 191
        %s184 = scalar_select %p183, %s182, 191
        %s185 = smul.addr %s184, 8
        %s186 = scalar_lea.vmem %s0, %s185
        %s187 = smul.u32 64, %s12
      $region36: #{tpu_custom_call.1} parent=31 // pred_fallthru
        _
    $region32: #{tpu_custom_call.1} parent=5 // pred_fallthru
      _
    %p188 = scmp.le.s32.totalorder 1, %s12
    %p189 = scmp.lt.s32.totalorder %s12, 4
    %p190 = pnand %p188, %p189
    %p191 = pneg %p190
    // Predicated region
    $region37: #{tpu_custom_call.1} parent=5 // pred_check
      _
    $region38: #{tpu_custom_call.1} parent=5 // pred_check_branch
      %193 = sbr.rel (%p190) target = $region40
    $region39: #{tpu_custom_call.1} parent=5 // pred_region
      %s194 = ssub.s32 %s12, 1
      %s195 = smul.u32 64, %s17
      %p196 = scmp.lt.s32.totalorder %s195, 191
      %s197 = scalar_select %p196, %s195, 191
      %s198 = smul.addr %s197, 8
      %s199 = scalar_lea.vmem %s0, %s198
      %p200 = pneg %p38
      %p201 = pneg %p35
      %p202 = pneg %p59
      %p203 = pneg %p56
      %p204 = pneg %p80
      %p205 = pneg %p77
      %p206 = pneg %p101
      %p207 = pneg %p98
      %p208 = pneg %p122
      %p209 = pneg %p119
      %p210 = pneg %p148
      %p211 = pneg %p145
      %s212 = smul.u32 64, %s17
      %p213 = scmp.lt.s32.totalorder %s212, 191
      %s214 = scalar_select %p213, %s212, 191
      %s215 = smul.addr %s214, 8
      %s216 = scalar_lea.vmem %s5, %s215
      %s217 = smul.u32 64, %s17
      %p218 = scmp.lt.s32.totalorder %s217, 191
      %s219 = scalar_select %p218, %s217, 191
      %s220 = smul.addr %s219, 8
      %s221 = scalar_lea.vmem %s0, %s220
      %s222 = smul.u32 64, %s17
      %s223 = smul.u32 64, %s17
      %p224 = scmp.lt.s32.totalorder %s223, 191
      %s225 = scalar_select %p224, %s223, 191
      %s226 = smul.addr %s225, 8
      %s227 = scalar_lea.vmem %s5, %s226
      %s228 = smul.u32 64, %s17
      %v229 = vld [vmem:[%s221] sm:$0xff]
      %v230 = vld [vmem:[%s221 + $0x8] sm:$0xff]
      %v231 = vld [vmem:[%s221 + $0x10] sm:$0xff]
      %v232 = vld [vmem:[%s221 + $0x18] sm:$0xff]
      %v233 = vld [vmem:[%s221 + $0x20] sm:$0xff]
      %v234 = vld [vmem:[%s221 + $0x28] sm:$0xff]
      %v235 = vld [vmem:[%s221 + $0x30] sm:$0xff]
      %v236 = vld [vmem:[%s221 + $0x38] sm:$0xff]
      %v237 = vld [vmem:[%s221 + $0x40] sm:$0xff]
      %v238 = vld [vmem:[%s221 + $0x48] sm:$0xff]
      %v239 = vld [vmem:[%s221 + $0x50] sm:$0xff]
      %v240 = vld [vmem:[%s221 + $0x58] sm:$0xff]
      %v241 = vld [vmem:[%s221 + $0x60] sm:$0xff]
      %v242 = vld [vmem:[%s221 + $0x68] sm:$0xff]
      %v243 = vld [vmem:[%s221 + $0x70] sm:$0xff]
      %v244 = vld [vmem:[%s221 + $0x78] sm:$0xff]
      %v245 = vld [vmem:[%s221 + $0x80] sm:$0xff]
      %v246 = vld [vmem:[%s221 + $0x88] sm:$0xff]
      %v247 = vld [vmem:[%s221 + $0x90] sm:$0xff]
      %v248 = vld [vmem:[%s221 + $0x98] sm:$0xff]
      %v249 = vld [vmem:[%s221 + $0xa0] sm:$0xff]
      %v250 = vld [vmem:[%s221 + $0xa8] sm:$0xff]
      %v251 = vld [vmem:[%s221 + $0xb0] sm:$0xff]
      %v252 = vld [vmem:[%s221 + $0xb8] sm:$0xff]
      %v253 = vld [vmem:[%s221 + $0xc0] sm:$0xff]
      %v254 = vld [vmem:[%s221 + $0xc8] sm:$0xff]
      %v255 = vld [vmem:[%s221 + $0xd0] sm:$0xff]
      %v256 = vld [vmem:[%s221 + $0xd8] sm:$0xff]
      %v257 = vld [vmem:[%s221 + $0xe0] sm:$0xff]
      %v258 = vld [vmem:[%s221 + $0xe8] sm:$0xff]
      %v259 = vld [vmem:[%s221 + $0xf0] sm:$0xff]
      %v260 = vld [vmem:[%s221 + $0xf8] sm:$0xff]
      %v261 = vld [vmem:[%s221 + $0x100] sm:$0xff]
      %v262 = vld [vmem:[%s221 + $0x108] sm:$0xff]
      %v263 = vld [vmem:[%s221 + $0x110] sm:$0xff]
      %v264 = vld [vmem:[%s221 + $0x118] sm:$0xff]
      %v265 = vld [vmem:[%s221 + $0x120] sm:$0xff]
      %v266 = vld [vmem:[%s221 + $0x128] sm:$0xff]
      %v267 = vld [vmem:[%s221 + $0x130] sm:$0xff]
      %v268 = vld [vmem:[%s221 + $0x138] sm:$0xff]
      %v269 = vld [vmem:[%s221 + $0x140] sm:$0xff]
      %v270 = vld [vmem:[%s221 + $0x148] sm:$0xff]
      %v271 = vld [vmem:[%s221 + $0x150] sm:$0xff]
      %v272 = vld [vmem:[%s221 + $0x158] sm:$0xff]
      %v273 = vld [vmem:[%s221 + $0x160] sm:$0xff]
      %v274 = vld [vmem:[%s221 + $0x168] sm:$0xff]
      %v275 = vld [vmem:[%s221 + $0x170] sm:$0xff]
      %v276 = vld [vmem:[%s221 + $0x178] sm:$0xff]
      %v277 = vld [vmem:[%s221 + $0x180] sm:$0xff]
      %v278 = vld [vmem:[%s221 + $0x188] sm:$0xff]
      %v279 = vld [vmem:[%s221 + $0x190] sm:$0xff]
      %v280 = vld [vmem:[%s221 + $0x198] sm:$0xff]
      %v281 = vld [vmem:[%s221 + $0x1a0] sm:$0xff]
      %v282 = vld [vmem:[%s221 + $0x1a8] sm:$0xff]
      %v283 = vld [vmem:[%s221 + $0x1b0] sm:$0xff]
      %v284 = vld [vmem:[%s221 + $0x1b8] sm:$0xff]
      %v285 = vld [vmem:[%s221 + $0x1c0] sm:$0xff]
      %v286 = vld [vmem:[%s221 + $0x1c8] sm:$0xff]
      %v287 = vld [vmem:[%s221 + $0x1d0] sm:$0xff]
      %v288 = vld [vmem:[%s221 + $0x1d8] sm:$0xff]
      %v289 = vld [vmem:[%s221 + $0x1e0] sm:$0xff]
      %v290 = vld [vmem:[%s221 + $0x1e8] sm:$0xff]
      %v291 = vld [vmem:[%s221 + $0x1f0] sm:$0xff]
      %v292 = vld [vmem:[%s221 + $0x1f8] sm:$0xff]
      %v293 = vld [vmem:[%s1] sm:$0xff]
      %v294 = vld [vmem:[%s1 + $0x8] sm:$0xff]
      %v295 = vld [vmem:[%s1 + $0x10] sm:$0xff]
      %v296 = vld [vmem:[%s2] sm:$0x1]
      %v298 = vlaneseq
      %v299 = vshrl.u32 %v298, 7
      %v300 = vsub.s32 0, %v299
      %v301 = vrot.slane %v296, %v300
      %vm303 = vcmask 195584
      %v305 = vsel %vm303, %v229, 0
      %v308 = vsel %vm303, %v230, 0
      %v311 = vsel %vm303, %v231, 0
      %v314 = vsel %vm303, %v232, 0
      %v317 = vsel %vm303, %v233, 0
      %v320 = vsel %vm303, %v234, 0
      %v323 = vsel %vm303, %v235, 0
      %v326 = vsel %vm303, %v236, 0
      %v329 = vsel %vm303, %v237, 0
      %v332 = vsel %vm303, %v238, 0
      %v335 = vsel %vm303, %v239, 0
      %v338 = vsel %vm303, %v240, 0
      %v341 = vsel %vm303, %v241, 0
      %v344 = vsel %vm303, %v242, 0
      %v347 = vsel %vm303, %v243, 0
      %v350 = vsel %vm303, %v244, 0
      %v353 = vsel %vm303, %v245, 0
      %v356 = vsel %vm303, %v246, 0
      %v359 = vsel %vm303, %v247, 0
      %v362 = vsel %vm303, %v248, 0
      %v365 = vsel %vm303, %v249, 0
      %v368 = vsel %vm303, %v250, 0
      %v371 = vsel %vm303, %v251, 0
      %v374 = vsel %vm303, %v252, 0
      %v377 = vsel %vm303, %v253, 0
      %v380 = vsel %vm303, %v254, 0
      %v383 = vsel %vm303, %v255, 0
      %v386 = vsel %vm303, %v256, 0
      %v389 = vsel %vm303, %v257, 0
      %v392 = vsel %vm303, %v258, 0
      %v395 = vsel %vm303, %v259, 0
      %v398 = vsel %vm303, %v260, 0
      %v401 = vsel %vm303, %v261, 0
      %v404 = vsel %vm303, %v262, 0
      %v407 = vsel %vm303, %v263, 0
      %v410 = vsel %vm303, %v264, 0
      %v413 = vsel %vm303, %v265, 0
      %v416 = vsel %vm303, %v266, 0
      %v419 = vsel %vm303, %v267, 0
      %v422 = vsel %vm303, %v268, 0
      %v425 = vsel %vm303, %v269, 0
      %v428 = vsel %vm303, %v270, 0
      %v431 = vsel %vm303, %v271, 0
      %v434 = vsel %vm303, %v272, 0
      %v437 = vsel %vm303, %v273, 0
      %v440 = vsel %vm303, %v274, 0
      %v443 = vsel %vm303, %v275, 0
      %v446 = vsel %vm303, %v276, 0
      %v449 = vsel %vm303, %v277, 0
      %v452 = vsel %vm303, %v278, 0
      %v455 = vsel %vm303, %v279, 0
      %v458 = vsel %vm303, %v280, 0
      %v461 = vsel %vm303, %v281, 0
      %v464 = vsel %vm303, %v282, 0
      %v467 = vsel %vm303, %v283, 0
      %v470 = vsel %vm303, %v284, 0
      %v473 = vsel %vm303, %v285, 0
      %v476 = vsel %vm303, %v286, 0
      %v479 = vsel %vm303, %v287, 0
      %v482 = vsel %vm303, %v288, 0
      %v485 = vsel %vm303, %v289, 0
      %v488 = vsel %vm303, %v290, 0
      %v491 = vsel %vm303, %v291, 0
      %v494 = vsel %vm303, %v292, 0
      %496 = vmatprep.subr.mxu0 0.0
      %497 = vmatpush1.msra.mxu0 %v293
      %498 = vmatprep.subr.mxu0 0.0
      %499 = vmatpush1.msra.mxu0 %v294
      %500 = vmatprep.subr.mxu0 0.0
      %501 = vmatpush1.msra.mxu0 %v295
      %502 = vmatprep.subr.mxu0 0.0
      %503 = vmatpush1.msra.mxu0 0.0
      %504 = vmatprep.subr.mxu0 0.0
      %505 = vmatpush1.msra.mxu0 0.0
      %506 = vmatprep.subr.mxu0 0.0
      %507 = vmatpush1.msra.mxu0 0.0
      %508 = vmatprep.subr.mxu0 0.0
      %509 = vmatpush1.msra.mxu0 0.0
      %510 = vmatprep.subr.mxu0 0.0
      %511 = vmatpush1.msra.mxu0 0.0
      %512 = vmatprep.subr.mxu0 0.0
      %513 = vmatpush1.msra.mxu0 0.0
      %514 = vmatprep.subr.mxu0 0.0
      %515 = vmatpush1.msra.mxu0 0.0
      %516 = vmatprep.subr.mxu0 0.0
      %517 = vmatpush1.msra.mxu0 0.0
      %518 = vmatprep.subr.mxu0 0.0
      %519 = vmatpush1.msra.mxu0 0.0
      %520 = vmatprep.subr.mxu0 0.0
      %521 = vmatpush1.msra.mxu0 0.0
      %522 = vmatprep.subr.mxu0 0.0
      %523 = vmatpush1.msra.mxu0 0.0
      %524 = vmatprep.subr.mxu0 0.0
      %525 = vmatpush1.msra.mxu0 0.0
      %526 = vmatprep.subr.mxu0 0.0
      %527 = vmatpush1.msra.mxu0 0.0
      %528 = vmatprep.subr.mxu0 0.0
      %529 = vmatpush1.msra.mxu0 0.0
      %530 = vmatprep.subr.mxu0 0.0
      %531 = vmatpush1.msra.mxu0 0.0
      %532 = vmatprep.subr.mxu0 0.0
      %533 = vmatpush1.msra.mxu0 0.0
      %534 = vmatprep.subr.mxu0 0.0
      %535 = vmatpush1.msra.mxu0 0.0
      %536 = vmatprep.subr.mxu0 0.0
      %537 = vmatpush1.msra.mxu0 0.0
      %538 = vmatprep.subr.mxu0 0.0
      %539 = vmatpush1.msra.mxu0 0.0
      %540 = vmatprep.subr.mxu0 0.0
      %541 = vmatpush1.msra.mxu0 0.0
      %542 = vmatprep.subr.mxu0 0.0
      %543 = vmatpush1.msra.mxu0 0.0
      %544 = vmatprep.subr.mxu0 0.0
      %545 = vmatpush1.msra.mxu0 0.0
      %546 = vmatprep.subr.mxu0 0.0
      %547 = vmatpush1.msra.mxu0 0.0
      %548 = vmatprep.subr.mxu0 0.0
      %549 = vmatpush1.msra.mxu0 0.0
      %550 = vmatprep.subr.mxu0 0.0
      %551 = vmatpush1.msra.mxu0 0.0
      %552 = vmatprep.subr.mxu0 0.0
      %553 = vmatpush1.msra.mxu0 0.0
      %554 = vmatprep.subr.mxu0 0.0
      %555 = vmatpush1.msra.mxu0 0.0
      %556 = vmatprep.subr.mxu0 0.0
      %557 = vmatpush1.msra.mxu0 0.0
      %558 = vmatprep.subr.mxu0 0.0
      %559 = vmatpush1.msra.mxu0 0.0
      %560 = vmatprep.mubr.f32.mxu0 0.0
      %561 = vmatmul.mubr.f32.gmra.mrb[0].mxu0 %v305
      %v562 = vpop.f32.mrb[0].mxu0
      %v563 = vadd.f32 %v301, %v562
      %v564 = vpop.f32.mrb[0].mxu0
      %565 = vmatprep.mubr.f32.mxu0 0.0
      %566 = vmatmul.mubr.f32.gmra.mrb[0].mxu0 %v308
      %v567 = vpop.f32.mrb[0].mxu0
      %v568 = vadd.f32 %v301, %v567
      %v569 = vpop.f32.mrb[0].mxu0
      %570 = vmatprep.mubr.f32.mxu0 0.0
      %571 = vmatmul.mubr.f32.gmra.mrb[0].mxu0 %v311
      %v572 = vpop.f32.mrb[0].mxu0
      %v573 = vadd.f32 %v301, %v572
      %v574 = vpop.f32.mrb[0].mxu0
      %575 = vmatprep.mubr.f32.mxu0 0.0
      %576 = vmatmul.mubr.f32.gmra.mrb[0].mxu0 %v314
      %v577 = vpop.f32.mrb[0].mxu0
      %v578 = vadd.f32 %v301, %v577
      %v579 = vpop.f32.mrb[0].mxu0
      %580 = vmatprep.mubr.f32.mxu0 0.0
      %581 = vmatmul.mubr.f32.gmra.mrb[0].mxu0 %v317
      %v582 = vpop.f32.mrb[0].mxu0
      %v583 = vadd.f32 %v301, %v582
      %v584 = vpop.f32.mrb[0].mxu0
      %585 = vmatprep.mubr.f32.mxu0 0.0
      %586 = vmatmul.mubr.f32.gmra.mrb[0].mxu0 %v320
      %v587 = vpop.f32.mrb[0].mxu0
      %v588 = vadd.f32 %v301, %v587
      %v589 = vpop.f32.mrb[0].mxu0
      %590 = vmatprep.mubr.f32.mxu0 0.0
      %591 = vmatmul.mubr.f32.gmra.mrb[0].mxu0 %v323
      %v592 = vpop.f32.mrb[0].mxu0
      %v593 = vadd.f32 %v301, %v592
      %v594 = vpop.f32.mrb[0].mxu0
      %595 = vmatprep.mubr.f32.mxu0 0.0
      %596 = vmatmul.mubr.f32.gmra.mrb[0].mxu0 %v326
      %v597 = vpop.f32.mrb[0].mxu0
      %v598 = vadd.f32 %v301, %v597
      %v599 = vpop.f32.mrb[0].mxu0
      %600 = vmatprep.mubr.f32.mxu0 0.0
      %601 = vmatmul.mubr.f32.gmra.mrb[0].mxu0 %v329
      %v602 = vpop.f32.mrb[0].mxu0
      %v603 = vadd.f32 %v301, %v602
      %v604 = vpop.f32.mrb[0].mxu0
      %605 = vmatprep.mubr.f32.mxu0 0.0
      %606 = vmatmul.mubr.f32.gmra.mrb[0].mxu0 %v332
      %v607 = vpop.f32.mrb[0].mxu0
      %v608 = vadd.f32 %v301, %v607
      %v609 = vpop.f32.mrb[0].mxu0
      %610 = vmatprep.mubr.f32.mxu0 0.0
      %611 = vmatmul.mubr.f32.gmra.mrb[0].mxu0 %v335
      %v612 = vpop.f32.mrb[0].mxu0
      %v613 = vadd.f32 %v301, %v612
      %v614 = vpop.f32.mrb[0].mxu0
      %615 = vmatprep.mubr.f32.mxu0 0.0
      %616 = vmatmul.mubr.f32.gmra.mrb[0].mxu0 %v338
      %v617 = vpop.f32.mrb[0].mxu0
      %v618 = vadd.f32 %v301, %v617
      %v619 = vpop.f32.mrb[0].mxu0
      %620 = vmatprep.mubr.f32.mxu0 0.0
      %621 = vmatmul.mubr.f32.gmra.mrb[0].mxu0 %v341
      %v622 = vpop.f32.mrb[0].mxu0
      %v623 = vadd.f32 %v301, %v622
      %v624 = vpop.f32.mrb[0].mxu0
      %625 = vmatprep.mubr.f32.mxu0 0.0
      %626 = vmatmul.mubr.f32.gmra.mrb[0].mxu0 %v344
      %v627 = vpop.f32.mrb[0].mxu0
      %v628 = vadd.f32 %v301, %v627
      %v629 = vpop.f32.mrb[0].mxu0
      %630 = vmatprep.mubr.f32.mxu0 0.0
      %631 = vmatmul.mubr.f32.gmra.mrb[0].mxu0 %v347
      %v632 = vpop.f32.mrb[0].mxu0
      %v633 = vadd.f32 %v301, %v632
      %v634 = vpop.f32.mrb[0].mxu0
      %635 = vmatprep.mubr.f32.mxu0 0.0
      %636 = vmatmul.mubr.f32.gmra.mrb[0].mxu0 %v350
      %v637 = vpop.f32.mrb[0].mxu0
      %v638 = vadd.f32 %v301, %v637
      %v639 = vpop.f32.mrb[0].mxu0
      %640 = vmatprep.mubr.f32.mxu0 0.0
      %641 = vmatmul.mubr.f32.gmra.mrb[0].mxu0 %v353
      %v642 = vpop.f32.mrb[0].mxu0
      %v643 = vadd.f32 %v301, %v642
      %v644 = vpop.f32.mrb[0].mxu0
      %645 = vmatprep.mubr.f32.mxu0 0.0
      %646 = vmatmul.mubr.f32.gmra.mrb[0].mxu0 %v356
      %v647 = vpop.f32.mrb[0].mxu0
      %v648 = vadd.f32 %v301, %v647
      %v649 = vpop.f32.mrb[0].mxu0
      %650 = vmatprep.mubr.f32.mxu0 0.0
      %651 = vmatmul.mubr.f32.gmra.mrb[0].mxu0 %v359
      %v652 = vpop.f32.mrb[0].mxu0
      %v653 = vadd.f32 %v301, %v652
      %v654 = vpop.f32.mrb[0].mxu0
      %655 = vmatprep.mubr.f32.mxu0 0.0
      %656 = vmatmul.mubr.f32.gmra.mrb[0].mxu0 %v362
      %v657 = vpop.f32.mrb[0].mxu0
      %v658 = vadd.f32 %v301, %v657
      %v659 = vpop.f32.mrb[0].mxu0
      %660 = vmatprep.mubr.f32.mxu0 0.0
      %661 = vmatmul.mubr.f32.gmra.mrb[0].mxu0 %v365
      %v662 = vpop.f32.mrb[0].mxu0
      %v663 = vadd.f32 %v301, %v662
      %v664 = vpop.f32.mrb[0].mxu0
      %665 = vmatprep.mubr.f32.mxu0 0.0
      %666 = vmatmul.mubr.f32.gmra.mrb[0].mxu0 %v368
      %v667 = vpop.f32.mrb[0].mxu0
      %v668 = vadd.f32 %v301, %v667
      %v669 = vpop.f32.mrb[0].mxu0
      %670 = vmatprep.mubr.f32.mxu0 0.0
      %671 = vmatmul.mubr.f32.gmra.mrb[0].mxu0 %v371
      %v672 = vpop.f32.mrb[0].mxu0
      %v673 = vadd.f32 %v301, %v672
      %v674 = vpop.f32.mrb[0].mxu0
      %675 = vmatprep.mubr.f32.mxu0 0.0
      %676 = vmatmul.mubr.f32.gmra.mrb[0].mxu0 %v374
      %v677 = vpop.f32.mrb[0].mxu0
      %v678 = vadd.f32 %v301, %v677
      %v679 = vpop.f32.mrb[0].mxu0
      %680 = vmatprep.mubr.f32.mxu0 0.0
      %681 = vmatmul.mubr.f32.gmra.mrb[0].mxu0 %v377
      %v682 = vpop.f32.mrb[0].mxu0
      %v683 = vadd.f32 %v301, %v682
      %v684 = vpop.f32.mrb[0].mxu0
      %685 = vmatprep.mubr.f32.mxu0 0.0
      %686 = vmatmul.mubr.f32.gmra.mrb[0].mxu0 %v380
      %v687 = vpop.f32.mrb[0].mxu0
      %v688 = vadd.f32 %v301, %v687
      %v689 = vpop.f32.mrb[0].mxu0
      %690 = vmatprep.mubr.f32.mxu0 0.0
      %691 = vmatmul.mubr.f32.gmra.mrb[0].mxu0 %v383
      %v692 = vpop.f32.mrb[0].mxu0
      %v693 = vadd.f32 %v301, %v692
      %v694 = vpop.f32.mrb[0].mxu0
      %695 = vmatprep.mubr.f32.mxu0 0.0
      %696 = vmatmul.mubr.f32.gmra.mrb[0].mxu0 %v386
      %v697 = vpop.f32.mrb[0].mxu0
      %v698 = vadd.f32 %v301, %v697
      %v699 = vpop.f32.mrb[0].mxu0
      %700 = vmatprep.mubr.f32.mxu0 0.0
      %701 = vmatmul.mubr.f32.gmra.mrb[0].mxu0 %v389
      %v702 = vpop.f32.mrb[0].mxu0
      %v703 = vadd.f32 %v301, %v702
      %v704 = vpop.f32.mrb[0].mxu0
      %705 = vmatprep.mubr.f32.mxu0 0.0
      %706 = vmatmul.mubr.f32.gmra.mrb[0].mxu0 %v392
      %v707 = vpop.f32.mrb[0].mxu0
      %v708 = vadd.f32 %v301, %v707
      %v709 = vpop.f32.mrb[0].mxu0
      %710 = vmatprep.mubr.f32.mxu0 0.0
      %711 = vmatmul.mubr.f32.gmra.mrb[0].mxu0 %v395
      %v712 = vpop.f32.mrb[0].mxu0
      %v713 = vadd.f32 %v301, %v712
      %v714 = vpop.f32.mrb[0].mxu0
      %715 = vmatprep.mubr.f32.mxu0 0.0
      %716 = vmatmul.mubr.f32.gmra.mrb[0].mxu0 %v398
      %v717 = vpop.f32.mrb[0].mxu0
      %v718 = vadd.f32 %v301, %v717
      %v719 = vpop.f32.mrb[0].mxu0
      %720 = vmatprep.mubr.f32.mxu0 0.0
      %721 = vmatmul.mubr.f32.gmra.mrb[0].mxu0 %v401
      %v722 = vpop.f32.mrb[0].mxu0
      %v723 = vadd.f32 %v301, %v722
      %v724 = vpop.f32.mrb[0].mxu0
      %725 = vmatprep.mubr.f32.mxu0 0.0
      %726 = vmatmul.mubr.f32.gmra.mrb[0].mxu0 %v404
      %v727 = vpop.f32.mrb[0].mxu0
      %v728 = vadd.f32 %v301, %v727
      %v729 = vpop.f32.mrb[0].mxu0
      %730 = vmatprep.mubr.f32.mxu0 0.0
      %731 = vmatmul.mubr.f32.gmra.mrb[0].mxu0 %v407
      %v732 = vpop.f32.mrb[0].mxu0
      %v733 = vadd.f32 %v301, %v732
      %v734 = vpop.f32.mrb[0].mxu0
      %735 = vmatprep.mubr.f32.mxu0 0.0
      %736 = vmatmul.mubr.f32.gmra.mrb[0].mxu0 %v410
      %v737 = vpop.f32.mrb[0].mxu0
      %v738 = vadd.f32 %v301, %v737
      %v739 = vpop.f32.mrb[0].mxu0
      %740 = vmatprep.mubr.f32.mxu0 0.0
      %741 = vmatmul.mubr.f32.gmra.mrb[0].mxu0 %v413
      %v742 = vpop.f32.mrb[0].mxu0
      %v743 = vadd.f32 %v301, %v742
      %v744 = vpop.f32.mrb[0].mxu0
      %745 = vmatprep.mubr.f32.mxu0 0.0
      %746 = vmatmul.mubr.f32.gmra.mrb[0].mxu0 %v416
      %v747 = vpop.f32.mrb[0].mxu0
      %v748 = vadd.f32 %v301, %v747
      %v749 = vpop.f32.mrb[0].mxu0
      %750 = vmatprep.mubr.f32.mxu0 0.0
      %751 = vmatmul.mubr.f32.gmra.mrb[0].mxu0 %v419
      %v752 = vpop.f32.mrb[0].mxu0
      %v753 = vadd.f32 %v301, %v752
      %v754 = vpop.f32.mrb[0].mxu0
      %755 = vmatprep.mubr.f32.mxu0 0.0
      %756 = vmatmul.mubr.f32.gmra.mrb[0].mxu0 %v422
      %v757 = vpop.f32.mrb[0].mxu0
      %v758 = vadd.f32 %v301, %v757
      %v759 = vpop.f32.mrb[0].mxu0
      %760 = vmatprep.mubr.f32.mxu0 0.0
      %761 = vmatmul.mubr.f32.gmra.mrb[0].mxu0 %v425
      %v762 = vpop.f32.mrb[0].mxu0
      %v763 = vadd.f32 %v301, %v762
      %v764 = vpop.f32.mrb[0].mxu0
      %765 = vmatprep.mubr.f32.mxu0 0.0
      %766 = vmatmul.mubr.f32.gmra.mrb[0].mxu0 %v428
      %v767 = vpop.f32.mrb[0].mxu0
      %v768 = vadd.f32 %v301, %v767
      %v769 = vpop.f32.mrb[0].mxu0
      %770 = vmatprep.mubr.f32.mxu0 0.0
      %771 = vmatmul.mubr.f32.gmra.mrb[0].mxu0 %v431
      %v772 = vpop.f32.mrb[0].mxu0
      %v773 = vadd.f32 %v301, %v772
      %v774 = vpop.f32.mrb[0].mxu0
      %775 = vmatprep.mubr.f32.mxu0 0.0
      %776 = vmatmul.mubr.f32.gmra.mrb[0].mxu0 %v434
      %v777 = vpop.f32.mrb[0].mxu0
      %v778 = vadd.f32 %v301, %v777
      %v779 = vpop.f32.mrb[0].mxu0
      %780 = vmatprep.mubr.f32.mxu0 0.0
      %781 = vmatmul.mubr.f32.gmra.mrb[0].mxu0 %v437
      %v782 = vpop.f32.mrb[0].mxu0
      %v783 = vadd.f32 %v301, %v782
      %v784 = vpop.f32.mrb[0].mxu0
      %785 = vmatprep.mubr.f32.mxu0 0.0
      %786 = vmatmul.mubr.f32.gmra.mrb[0].mxu0 %v440
      %v787 = vpop.f32.mrb[0].mxu0
      %v788 = vadd.f32 %v301, %v787
      %v789 = vpop.f32.mrb[0].mxu0
      %790 = vmatprep.mubr.f32.mxu0 0.0
      %791 = vmatmul.mubr.f32.gmra.mrb[0].mxu0 %v443
      %v792 = vpop.f32.mrb[0].mxu0
      %v793 = vadd.f32 %v301, %v792
      %v794 = vpop.f32.mrb[0].mxu0
      %795 = vmatprep.mubr.f32.mxu0 0.0
      %796 = vmatmul.mubr.f32.gmra.mrb[0].mxu0 %v446
      %v797 = vpop.f32.mrb[0].mxu0
      %v798 = vadd.f32 %v301, %v797
      %v799 = vpop.f32.mrb[0].mxu0
      %800 = vmatprep.mubr.f32.mxu0 0.0
      %801 = vmatmul.mubr.f32.gmra.mrb[0].mxu0 %v449
      %v802 = vpop.f32.mrb[0].mxu0
      %v803 = vadd.f32 %v301, %v802
      %v804 = vpop.f32.mrb[0].mxu0
      %805 = vmatprep.mubr.f32.mxu0 0.0
      %806 = vmatmul.mubr.f32.gmra.mrb[0].mxu0 %v452
      %v807 = vpop.f32.mrb[0].mxu0
      %v808 = vadd.f32 %v301, %v807
      %v809 = vpop.f32.mrb[0].mxu0
      %810 = vmatprep.mubr.f32.mxu0 0.0
      %811 = vmatmul.mubr.f32.gmra.mrb[0].mxu0 %v455
      %v812 = vpop.f32.mrb[0].mxu0
      %v813 = vadd.f32 %v301, %v812
      %v814 = vpop.f32.mrb[0].mxu0
      %815 = vmatprep.mubr.f32.mxu0 0.0
      %816 = vmatmul.mubr.f32.gmra.mrb[0].mxu0 %v458
      %v817 = vpop.f32.mrb[0].mxu0
      %v818 = vadd.f32 %v301, %v817
      %v819 = vpop.f32.mrb[0].mxu0
      %820 = vmatprep.mubr.f32.mxu0 0.0
      %821 = vmatmul.mubr.f32.gmra.mrb[0].mxu0 %v461
      %v822 = vpop.f32.mrb[0].mxu0
      %v823 = vadd.f32 %v301, %v822
      %v824 = vpop.f32.mrb[0].mxu0
      %825 = vmatprep.mubr.f32.mxu0 0.0
      %826 = vmatmul.mubr.f32.gmra.mrb[0].mxu0 %v464
      %v827 = vpop.f32.mrb[0].mxu0
      %v828 = vadd.f32 %v301, %v827
      %v829 = vpop.f32.mrb[0].mxu0
      %830 = vmatprep.mubr.f32.mxu0 0.0
      %831 = vmatmul.mubr.f32.gmra.mrb[0].mxu0 %v467
      %v832 = vpop.f32.mrb[0].mxu0
      %v833 = vadd.f32 %v301, %v832
      %v834 = vpop.f32.mrb[0].mxu0
      %835 = vmatprep.mubr.f32.mxu0 0.0
      %836 = vmatmul.mubr.f32.gmra.mrb[0].mxu0 %v470
      %v837 = vpop.f32.mrb[0].mxu0
      %v838 = vadd.f32 %v301, %v837
      %v839 = vpop.f32.mrb[0].mxu0
      %840 = vmatprep.mubr.f32.mxu0 0.0
      %841 = vmatmul.mubr.f32.gmra.mrb[0].mxu0 %v473
      %v842 = vpop.f32.mrb[0].mxu0
      %v843 = vadd.f32 %v301, %v842
      %v844 = vpop.f32.mrb[0].mxu0
      %845 = vmatprep.mubr.f32.mxu0 0.0
      %846 = vmatmul.mubr.f32.gmra.mrb[0].mxu0 %v476
      %v847 = vpop.f32.mrb[0].mxu0
      %v848 = vadd.f32 %v301, %v847
      %v849 = vpop.f32.mrb[0].mxu0
      %850 = vmatprep.mubr.f32.mxu0 0.0
      %851 = vmatmul.mubr.f32.gmra.mrb[0].mxu0 %v479
      %v852 = vpop.f32.mrb[0].mxu0
      %v853 = vadd.f32 %v301, %v852
      %v854 = vpop.f32.mrb[0].mxu0
      %855 = vmatprep.mubr.f32.mxu0 0.0
      %856 = vmatmul.mubr.f32.gmra.mrb[0].mxu0 %v482
      %v857 = vpop.f32.mrb[0].mxu0
      %v858 = vadd.f32 %v301, %v857
      %v859 = vpop.f32.mrb[0].mxu0
      %860 = vmatprep.mubr.f32.mxu0 0.0
      %861 = vmatmul.mubr.f32.gmra.mrb[0].mxu0 %v485
      %v862 = vpop.f32.mrb[0].mxu0
      %v863 = vadd.f32 %v301, %v862
      %v864 = vpop.f32.mrb[0].mxu0
      %865 = vmatprep.mubr.f32.mxu0 0.0
      %866 = vmatmul.mubr.f32.gmra.mrb[0].mxu0 %v488
      %v867 = vpop.f32.mrb[0].mxu0
      %v868 = vadd.f32 %v301, %v867
      %v869 = vpop.f32.mrb[0].mxu0
      %870 = vmatprep.mubr.f32.mxu0 0.0
      %871 = vmatmul.mubr.f32.gmra.mrb[0].mxu0 %v491
      %v872 = vpop.f32.mrb[0].mxu0
      %v873 = vadd.f32 %v301, %v872
      %v874 = vpop.f32.mrb[0].mxu0
      %875 = vmatprep.mubr.f32.mxu0 0.0
      %876 = vmatmul.mubr.f32.gmra.mrb[0].mxu0 %v494
      %v877 = vpop.f32.mrb[0].mxu0
      %v878 = vadd.f32 %v301, %v877
      %v879 = vpop.f32.mrb[0].mxu0
      %880 = vdwg.mxu0
      %v881 = vmax.f32 %v563, 0.0
      %v882 = vmax.f32 %v568, 0.0
      %v883 = vmax.f32 %v573, 0.0
      %v884 = vmax.f32 %v578, 0.0
      %v885 = vmax.f32 %v583, 0.0
      %v886 = vmax.f32 %v588, 0.0
      %v887 = vmax.f32 %v593, 0.0
      %v888 = vmax.f32 %v598, 0.0
      %v889 = vmax.f32 %v603, 0.0
      %v890 = vmax.f32 %v608, 0.0
      %v891 = vmax.f32 %v613, 0.0
      %v892 = vmax.f32 %v618, 0.0
      %v893 = vmax.f32 %v623, 0.0
      %v894 = vmax.f32 %v628, 0.0
      %v895 = vmax.f32 %v633, 0.0
      %v896 = vmax.f32 %v638, 0.0
      %v897 = vmax.f32 %v643, 0.0
      %v898 = vmax.f32 %v648, 0.0
      %v899 = vmax.f32 %v653, 0.0
      %v900 = vmax.f32 %v658, 0.0
      %v901 = vmax.f32 %v663, 0.0
      %v902 = vmax.f32 %v668, 0.0
      %v903 = vmax.f32 %v673, 0.0
      %v904 = vmax.f32 %v678, 0.0
      %v905 = vmax.f32 %v683, 0.0
      %v906 = vmax.f32 %v688, 0.0
      %v907 = vmax.f32 %v693, 0.0
      %v908 = vmax.f32 %v698, 0.0
      %v909 = vmax.f32 %v703, 0.0
      %v910 = vmax.f32 %v708, 0.0
      %v911 = vmax.f32 %v713, 0.0
      %v912 = vmax.f32 %v718, 0.0
      %v913 = vmax.f32 %v723, 0.0
      %v914 = vmax.f32 %v728, 0.0
      %v915 = vmax.f32 %v733, 0.0
      %v916 = vmax.f32 %v738, 0.0
      %v917 = vmax.f32 %v743, 0.0
      %v918 = vmax.f32 %v748, 0.0
      %v919 = vmax.f32 %v753, 0.0
      %v920 = vmax.f32 %v758, 0.0
      %v921 = vmax.f32 %v763, 0.0
      %v922 = vmax.f32 %v768, 0.0
      %v923 = vmax.f32 %v773, 0.0
      %v924 = vmax.f32 %v778, 0.0
      %v925 = vmax.f32 %v783, 0.0
      %v926 = vmax.f32 %v788, 0.0
      %v927 = vmax.f32 %v793, 0.0
      %v928 = vmax.f32 %v798, 0.0
      %v929 = vmax.f32 %v803, 0.0
      %v930 = vmax.f32 %v808, 0.0
      %v931 = vmax.f32 %v813, 0.0
      %v932 = vmax.f32 %v818, 0.0
      %v933 = vmax.f32 %v823, 0.0
      %v934 = vmax.f32 %v828, 0.0
      %v935 = vmax.f32 %v833, 0.0
      %v936 = vmax.f32 %v838, 0.0
      %v937 = vmax.f32 %v843, 0.0
      %v938 = vmax.f32 %v848, 0.0
      %v939 = vmax.f32 %v853, 0.0
      %v940 = vmax.f32 %v858, 0.0
      %v941 = vmax.f32 %v863, 0.0
      %v942 = vmax.f32 %v868, 0.0
      %v943 = vmax.f32 %v873, 0.0
      %v944 = vmax.f32 %v878, 0.0
      %s945 = sld [smem:[#allocation2]]
      %v946 = vld [vmem:[%s3] sm:$0x1]
      %v948 = vlaneseq
      %v949 = vshrl.u32 %v948, 7
      %v950 = vsub.s32 0, %v949
      %v951 = vrot.slane %v946, %v950
      %v953 = vmul.f32 %v881, %v951
      %v954 = vmul.f32 %v882, %v951
      %v955 = vmul.f32 %v883, %v951
      %v956 = vmul.f32 %v884, %v951
      %v957 = vmul.f32 %v885, %v951
      %v958 = vmul.f32 %v886, %v951
      %v959 = vmul.f32 %v887, %v951
      %v960 = vmul.f32 %v888, %v951
      %v961 = vmul.f32 %v889, %v951
      %v962 = vmul.f32 %v890, %v951
      %v963 = vmul.f32 %v891, %v951
      %v964 = vmul.f32 %v892, %v951
      %v965 = vmul.f32 %v893, %v951
      %v966 = vmul.f32 %v894, %v951
      %v967 = vmul.f32 %v895, %v951
      %v968 = vmul.f32 %v896, %v951
      %v969 = vmul.f32 %v897, %v951
      %v970 = vmul.f32 %v898, %v951
      %v971 = vmul.f32 %v899, %v951
      %v972 = vmul.f32 %v900, %v951
      %v973 = vmul.f32 %v901, %v951
      %v974 = vmul.f32 %v902, %v951
      %v975 = vmul.f32 %v903, %v951
      %v976 = vmul.f32 %v904, %v951
      %v977 = vmul.f32 %v905, %v951
      %v978 = vmul.f32 %v906, %v951
      %v979 = vmul.f32 %v907, %v951
      %v980 = vmul.f32 %v908, %v951
      %v981 = vmul.f32 %v909, %v951
      %v982 = vmul.f32 %v910, %v951
      %v983 = vmul.f32 %v911, %v951
      %v984 = vmul.f32 %v912, %v951
      %v985 = vmul.f32 %v913, %v951
      %v986 = vmul.f32 %v914, %v951
      %v987 = vmul.f32 %v915, %v951
      %v988 = vmul.f32 %v916, %v951
      %v989 = vmul.f32 %v917, %v951
      %v990 = vmul.f32 %v918, %v951
      %v991 = vmul.f32 %v919, %v951
      %v992 = vmul.f32 %v920, %v951
      %v993 = vmul.f32 %v921, %v951
      %v994 = vmul.f32 %v922, %v951
      %v995 = vmul.f32 %v923, %v951
      %v996 = vmul.f32 %v924, %v951
      %v997 = vmul.f32 %v925, %v951
      %v998 = vmul.f32 %v926, %v951
      %v999 = vmul.f32 %v927, %v951
      %v1000 = vmul.f32 %v928, %v951
      %v1001 = vmul.f32 %v929, %v951
      %v1002 = vmul.f32 %v930, %v951
      %v1003 = vmul.f32 %v931, %v951
      %v1004 = vmul.f32 %v932, %v951
      %v1005 = vmul.f32 %v933, %v951
      %v1006 = vmul.f32 %v934, %v951
      %v1007 = vmul.f32 %v935, %v951
      %v1008 = vmul.f32 %v936, %v951
      %v1009 = vmul.f32 %v937, %v951
      %v1010 = vmul.f32 %v938, %v951
      %v1011 = vmul.f32 %v939, %v951
      %v1012 = vmul.f32 %v940, %v951
      %v1013 = vmul.f32 %v941, %v951
      %v1014 = vmul.f32 %v942, %v951
      %v1015 = vmul.f32 %v943, %v951
      %v1016 = vmul.f32 %v944, %v951
      %vm1017 = vcmask 261120
      %v1018 = vsel %vm1017, %v953, 0.0
      %1019 = vadd.xlane.f32.xlu0 %v1018
      %v1020 = vpop.xlane.xlu0 %1019
      %v1021 = vsel %vm1017, %v954, 0.0
      %1022 = vadd.xlane.f32.xlu0 %v1021
      %v1023 = vpop.xlane.xlu0 %1022
      %v1024 = vsel %vm1017, %v955, 0.0
      %1025 = vadd.xlane.f32.xlu0 %v1024
      %v1026 = vpop.xlane.xlu0 %1025
      %v1027 = vsel %vm1017, %v956, 0.0
      %1028 = vadd.xlane.f32.xlu0 %v1027
      %v1029 = vpop.xlane.xlu0 %1028
      %v1030 = vsel %vm1017, %v957, 0.0
      %1031 = vadd.xlane.f32.xlu0 %v1030
      %v1032 = vpop.xlane.xlu0 %1031
      %v1033 = vsel %vm1017, %v958, 0.0
      %1034 = vadd.xlane.f32.xlu0 %v1033
      %v1035 = vpop.xlane.xlu0 %1034
      %v1036 = vsel %vm1017, %v959, 0.0
      %1037 = vadd.xlane.f32.xlu0 %v1036
      %v1038 = vpop.xlane.xlu0 %1037
      %v1039 = vsel %vm1017, %v960, 0.0
      %1040 = vadd.xlane.f32.xlu0 %v1039
      %v1041 = vpop.xlane.xlu0 %1040
      %v1042 = vsel %vm1017, %v961, 0.0
      %1043 = vadd.xlane.f32.xlu0 %v1042
      %v1044 = vpop.xlane.xlu0 %1043
      %v1045 = vsel %vm1017, %v962, 0.0
      %1046 = vadd.xlane.f32.xlu0 %v1045
      %v1047 = vpop.xlane.xlu0 %1046
      %v1048 = vsel %vm1017, %v963, 0.0
      %1049 = vadd.xlane.f32.xlu0 %v1048
      %v1050 = vpop.xlane.xlu0 %1049
      %v1051 = vsel %vm1017, %v964, 0.0
      %1052 = vadd.xlane.f32.xlu0 %v1051
      %v1053 = vpop.xlane.xlu0 %1052
      %v1054 = vsel %vm1017, %v965, 0.0
      %1055 = vadd.xlane.f32.xlu0 %v1054
      %v1056 = vpop.xlane.xlu0 %1055
      %v1057 = vsel %vm1017, %v966, 0.0
      %1058 = vadd.xlane.f32.xlu0 %v1057
      %v1059 = vpop.xlane.xlu0 %1058
      %v1060 = vsel %vm1017, %v967, 0.0
      %1061 = vadd.xlane.f32.xlu0 %v1060
      %v1062 = vpop.xlane.xlu0 %1061
      %v1063 = vsel %vm1017, %v968, 0.0
      %1064 = vadd.xlane.f32.xlu0 %v1063
      %v1065 = vpop.xlane.xlu0 %1064
      %v1066 = vsel %vm1017, %v969, 0.0
      %1067 = vadd.xlane.f32.xlu0 %v1066
      %v1068 = vpop.xlane.xlu0 %1067
      %v1069 = vsel %vm1017, %v970, 0.0
      %1070 = vadd.xlane.f32.xlu0 %v1069
      %v1071 = vpop.xlane.xlu0 %1070
      %v1072 = vsel %vm1017, %v971, 0.0
      %1073 = vadd.xlane.f32.xlu0 %v1072
      %v1074 = vpop.xlane.xlu0 %1073
      %v1075 = vsel %vm1017, %v972, 0.0
      %1076 = vadd.xlane.f32.xlu0 %v1075
      %v1077 = vpop.xlane.xlu0 %1076
      %v1078 = vsel %vm1017, %v973, 0.0
      %1079 = vadd.xlane.f32.xlu0 %v1078
      %v1080 = vpop.xlane.xlu0 %1079
      %v1081 = vsel %vm1017, %v974, 0.0
      %1082 = vadd.xlane.f32.xlu0 %v1081
      %v1083 = vpop.xlane.xlu0 %1082
      %v1084 = vsel %vm1017, %v975, 0.0
      %1085 = vadd.xlane.f32.xlu0 %v1084
      %v1086 = vpop.xlane.xlu0 %1085
      %v1087 = vsel %vm1017, %v976, 0.0
      %1088 = vadd.xlane.f32.xlu0 %v1087
      %v1089 = vpop.xlane.xlu0 %1088
      %v1090 = vsel %vm1017, %v977, 0.0
      %1091 = vadd.xlane.f32.xlu0 %v1090
      %v1092 = vpop.xlane.xlu0 %1091
      %v1093 = vsel %vm1017, %v978, 0.0
      %1094 = vadd.xlane.f32.xlu0 %v1093
      %v1095 = vpop.xlane.xlu0 %1094
      %v1096 = vsel %vm1017, %v979, 0.0
      %1097 = vadd.xlane.f32.xlu0 %v1096
      %v1098 = vpop.xlane.xlu0 %1097
      %v1099 = vsel %vm1017, %v980, 0.0
      %1100 = vadd.xlane.f32.xlu0 %v1099
      %v1101 = vpop.xlane.xlu0 %1100
      %v1102 = vsel %vm1017, %v981, 0.0
      %1103 = vadd.xlane.f32.xlu0 %v1102
      %v1104 = vpop.xlane.xlu0 %1103
      %v1105 = vsel %vm1017, %v982, 0.0
      %1106 = vadd.xlane.f32.xlu0 %v1105
      %v1107 = vpop.xlane.xlu0 %1106
      %v1108 = vsel %vm1017, %v983, 0.0
      %1109 = vadd.xlane.f32.xlu0 %v1108
      %v1110 = vpop.xlane.xlu0 %1109
      %v1111 = vsel %vm1017, %v984, 0.0
      %1112 = vadd.xlane.f32.xlu0 %v1111
      %v1113 = vpop.xlane.xlu0 %1112
      %v1114 = vsel %vm1017, %v985, 0.0
      %1115 = vadd.xlane.f32.xlu0 %v1114
      %v1116 = vpop.xlane.xlu0 %1115
      %v1117 = vsel %vm1017, %v986, 0.0
      %1118 = vadd.xlane.f32.xlu0 %v1117
      %v1119 = vpop.xlane.xlu0 %1118
      %v1120 = vsel %vm1017, %v987, 0.0
      %1121 = vadd.xlane.f32.xlu0 %v1120
      %v1122 = vpop.xlane.xlu0 %1121
      %v1123 = vsel %vm1017, %v988, 0.0
      %1124 = vadd.xlane.f32.xlu0 %v1123
      %v1125 = vpop.xlane.xlu0 %1124
      %v1126 = vsel %vm1017, %v989, 0.0
      %1127 = vadd.xlane.f32.xlu0 %v1126
      %v1128 = vpop.xlane.xlu0 %1127
      %v1129 = vsel %vm1017, %v990, 0.0
      %1130 = vadd.xlane.f32.xlu0 %v1129
      %v1131 = vpop.xlane.xlu0 %1130
      %v1132 = vsel %vm1017, %v991, 0.0
      %1133 = vadd.xlane.f32.xlu0 %v1132
      %v1134 = vpop.xlane.xlu0 %1133
      %v1135 = vsel %vm1017, %v992, 0.0
      %1136 = vadd.xlane.f32.xlu0 %v1135
      %v1137 = vpop.xlane.xlu0 %1136
      %v1138 = vsel %vm1017, %v993, 0.0
      %1139 = vadd.xlane.f32.xlu0 %v1138
      %v1140 = vpop.xlane.xlu0 %1139
      %v1141 = vsel %vm1017, %v994, 0.0
      %1142 = vadd.xlane.f32.xlu0 %v1141
      %v1143 = vpop.xlane.xlu0 %1142
      %v1144 = vsel %vm1017, %v995, 0.0
      %1145 = vadd.xlane.f32.xlu0 %v1144
      %v1146 = vpop.xlane.xlu0 %1145
      %v1147 = vsel %vm1017, %v996, 0.0
      %1148 = vadd.xlane.f32.xlu0 %v1147
      %v1149 = vpop.xlane.xlu0 %1148
      %v1150 = vsel %vm1017, %v997, 0.0
      %1151 = vadd.xlane.f32.xlu0 %v1150
      %v1152 = vpop.xlane.xlu0 %1151
      %v1153 = vsel %vm1017, %v998, 0.0
      %1154 = vadd.xlane.f32.xlu0 %v1153
      %v1155 = vpop.xlane.xlu0 %1154
      %v1156 = vsel %vm1017, %v999, 0.0
      %1157 = vadd.xlane.f32.xlu0 %v1156
      %v1158 = vpop.xlane.xlu0 %1157
      %v1159 = vsel %vm1017, %v1000, 0.0
      %1160 = vadd.xlane.f32.xlu0 %v1159
      %v1161 = vpop.xlane.xlu0 %1160
      %v1162 = vsel %vm1017, %v1001, 0.0
      %1163 = vadd.xlane.f32.xlu0 %v1162
      %v1164 = vpop.xlane.xlu0 %1163
      %v1165 = vsel %vm1017, %v1002, 0.0
      %1166 = vadd.xlane.f32.xlu0 %v1165
      %v1167 = vpop.xlane.xlu0 %1166
      %v1168 = vsel %vm1017, %v1003, 0.0
      %1169 = vadd.xlane.f32.xlu0 %v1168
      %v1170 = vpop.xlane.xlu0 %1169
      %v1171 = vsel %vm1017, %v1004, 0.0
      %1172 = vadd.xlane.f32.xlu0 %v1171
      %v1173 = vpop.xlane.xlu0 %1172
      %v1174 = vsel %vm1017, %v1005, 0.0
      %1175 = vadd.xlane.f32.xlu0 %v1174
      %v1176 = vpop.xlane.xlu0 %1175
      %v1177 = vsel %vm1017, %v1006, 0.0
      %1178 = vadd.xlane.f32.xlu0 %v1177
      %v1179 = vpop.xlane.xlu0 %1178
      %v1180 = vsel %vm1017, %v1007, 0.0
      %1181 = vadd.xlane.f32.xlu0 %v1180
      %v1182 = vpop.xlane.xlu0 %1181
      %v1183 = vsel %vm1017, %v1008, 0.0
      %1184 = vadd.xlane.f32.xlu0 %v1183
      %v1185 = vpop.xlane.xlu0 %1184
      %v1186 = vsel %vm1017, %v1009, 0.0
      %1187 = vadd.xlane.f32.xlu0 %v1186
      %v1188 = vpop.xlane.xlu0 %1187
      %v1189 = vsel %vm1017, %v1010, 0.0
      %1190 = vadd.xlane.f32.xlu0 %v1189
      %v1191 = vpop.xlane.xlu0 %1190
      %v1192 = vsel %vm1017, %v1011, 0.0
      %1193 = vadd.xlane.f32.xlu0 %v1192
      %v1194 = vpop.xlane.xlu0 %1193
      %v1195 = vsel %vm1017, %v1012, 0.0
      %1196 = vadd.xlane.f32.xlu0 %v1195
      %v1197 = vpop.xlane.xlu0 %1196
      %v1198 = vsel %vm1017, %v1013, 0.0
      %1199 = vadd.xlane.f32.xlu0 %v1198
      %v1200 = vpop.xlane.xlu0 %1199
      %v1201 = vsel %vm1017, %v1014, 0.0
      %1202 = vadd.xlane.f32.xlu0 %v1201
      %v1203 = vpop.xlane.xlu0 %1202
      %v1204 = vsel %vm1017, %v1015, 0.0
      %1205 = vadd.xlane.f32.xlu0 %v1204
      %v1206 = vpop.xlane.xlu0 %1205
      %v1207 = vsel %vm1017, %v1016, 0.0
      %1208 = vadd.xlane.f32.xlu0 %v1207
      %v1209 = vpop.xlane.xlu0 %1208
      %v1210 = vstv %s945
      %v1211 = vadd.f32 %v1020, %v1210
      %v1212 = vadd.f32 %v1023, %v1210
      %v1213 = vadd.f32 %v1026, %v1210
      %v1214 = vadd.f32 %v1029, %v1210
      %v1215 = vadd.f32 %v1032, %v1210
      %v1216 = vadd.f32 %v1035, %v1210
      %v1217 = vadd.f32 %v1038, %v1210
      %v1218 = vadd.f32 %v1041, %v1210
      %v1219 = vadd.f32 %v1044, %v1210
      %v1220 = vadd.f32 %v1047, %v1210
      %v1221 = vadd.f32 %v1050, %v1210
      %v1222 = vadd.f32 %v1053, %v1210
      %v1223 = vadd.f32 %v1056, %v1210
      %v1224 = vadd.f32 %v1059, %v1210
      %v1225 = vadd.f32 %v1062, %v1210
      %v1226 = vadd.f32 %v1065, %v1210
      %v1227 = vadd.f32 %v1068, %v1210
      %v1228 = vadd.f32 %v1071, %v1210
      %v1229 = vadd.f32 %v1074, %v1210
      %v1230 = vadd.f32 %v1077, %v1210
      %v1231 = vadd.f32 %v1080, %v1210
      %v1232 = vadd.f32 %v1083, %v1210
      %v1233 = vadd.f32 %v1086, %v1210
      %v1234 = vadd.f32 %v1089, %v1210
      %v1235 = vadd.f32 %v1092, %v1210
      %v1236 = vadd.f32 %v1095, %v1210
      %v1237 = vadd.f32 %v1098, %v1210
      %v1238 = vadd.f32 %v1101, %v1210
      %v1239 = vadd.f32 %v1104, %v1210
      %v1240 = vadd.f32 %v1107, %v1210
      %v1241 = vadd.f32 %v1110, %v1210
      %v1242 = vadd.f32 %v1113, %v1210
      %v1243 = vadd.f32 %v1116, %v1210
      %v1244 = vadd.f32 %v1119, %v1210
      %v1245 = vadd.f32 %v1122, %v1210
      %v1246 = vadd.f32 %v1125, %v1210
      %v1247 = vadd.f32 %v1128, %v1210
      %v1248 = vadd.f32 %v1131, %v1210
      %v1249 = vadd.f32 %v1134, %v1210
      %v1250 = vadd.f32 %v1137, %v1210
      %v1251 = vadd.f32 %v1140, %v1210
      %v1252 = vadd.f32 %v1143, %v1210
      %v1253 = vadd.f32 %v1146, %v1210
      %v1254 = vadd.f32 %v1149, %v1210
      %v1255 = vadd.f32 %v1152, %v1210
      %v1256 = vadd.f32 %v1155, %v1210
      %v1257 = vadd.f32 %v1158, %v1210
      %v1258 = vadd.f32 %v1161, %v1210
      %v1259 = vadd.f32 %v1164, %v1210
      %v1260 = vadd.f32 %v1167, %v1210
      %v1261 = vadd.f32 %v1170, %v1210
      %v1262 = vadd.f32 %v1173, %v1210
      %v1263 = vadd.f32 %v1176, %v1210
      %v1264 = vadd.f32 %v1179, %v1210
      %v1265 = vadd.f32 %v1182, %v1210
      %v1266 = vadd.f32 %v1185, %v1210
      %v1267 = vadd.f32 %v1188, %v1210
      %v1268 = vadd.f32 %v1191, %v1210
      %v1269 = vadd.f32 %v1194, %v1210
      %v1270 = vadd.f32 %v1197, %v1210
      %v1271 = vadd.f32 %v1200, %v1210
      %v1272 = vadd.f32 %v1203, %v1210
      %v1273 = vadd.f32 %v1206, %v1210
      %v1274 = vadd.f32 %v1209, %v1210
      %vm1275 = vcmask 7168
      %1276 = vst.msk [vmem:[%s227] sm:$0xff] %vm1275, %v1211
      %1277 = vst.msk [vmem:[%s227 + $0x8] sm:$0xff] %vm1275, %v1212
      %1278 = vst.msk [vmem:[%s227 + $0x10] sm:$0xff] %vm1275, %v1213
      %1279 = vst.msk [vmem:[%s227 + $0x18] sm:$0xff] %vm1275, %v1214
      %1280 = vst.msk [vmem:[%s227 + $0x20] sm:$0xff] %vm1275, %v1215
      %1281 = vst.msk [vmem:[%s227 + $0x28] sm:$0xff] %vm1275, %v1216
      %1282 = vst.msk [vmem:[%s227 + $0x30] sm:$0xff] %vm1275, %v1217
      %1283 = vst.msk [vmem:[%s227 + $0x38] sm:$0xff] %vm1275, %v1218
      %1284 = vst.msk [vmem:[%s227 + $0x40] sm:$0xff] %vm1275, %v1219
      %1285 = vst.msk [vmem:[%s227 + $0x48] sm:$0xff] %vm1275, %v1220
      %1286 = vst.msk [vmem:[%s227 + $0x50] sm:$0xff] %vm1275, %v1221
      %1287 = vst.msk [vmem:[%s227 + $0x58] sm:$0xff] %vm1275, %v1222
      %1288 = vst.msk [vmem:[%s227 + $0x60] sm:$0xff] %vm1275, %v1223
      %1289 = vst.msk [vmem:[%s227 + $0x68] sm:$0xff] %vm1275, %v1224
      %1290 = vst.msk [vmem:[%s227 + $0x70] sm:$0xff] %vm1275, %v1225
      %1291 = vst.msk [vmem:[%s227 + $0x78] sm:$0xff] %vm1275, %v1226
      %1292 = vst.msk [vmem:[%s227 + $0x80] sm:$0xff] %vm1275, %v1227
      %1293 = vst.msk [vmem:[%s227 + $0x88] sm:$0xff] %vm1275, %v1228
      %1294 = vst.msk [vmem:[%s227 + $0x90] sm:$0xff] %vm1275, %v1229
      %1295 = vst.msk [vmem:[%s227 + $0x98] sm:$0xff] %vm1275, %v1230
      %1296 = vst.msk [vmem:[%s227 + $0xa0] sm:$0xff] %vm1275, %v1231
      %1297 = vst.msk [vmem:[%s227 + $0xa8] sm:$0xff] %vm1275, %v1232
      %1298 = vst.msk [vmem:[%s227 + $0xb0] sm:$0xff] %vm1275, %v1233
      %1299 = vst.msk [vmem:[%s227 + $0xb8] sm:$0xff] %vm1275, %v1234
      %1300 = vst.msk [vmem:[%s227 + $0xc0] sm:$0xff] %vm1275, %v1235
      %1301 = vst.msk [vmem:[%s227 + $0xc8] sm:$0xff] %vm1275, %v1236
      %1302 = vst.msk [vmem:[%s227 + $0xd0] sm:$0xff] %vm1275, %v1237
      %1303 = vst.msk [vmem:[%s227 + $0xd8] sm:$0xff] %vm1275, %v1238
      %1304 = vst.msk [vmem:[%s227 + $0xe0] sm:$0xff] %vm1275, %v1239
      %1305 = vst.msk [vmem:[%s227 + $0xe8] sm:$0xff] %vm1275, %v1240
      %1306 = vst.msk [vmem:[%s227 + $0xf0] sm:$0xff] %vm1275, %v1241
      %1307 = vst.msk [vmem:[%s227 + $0xf8] sm:$0xff] %vm1275, %v1242
      %1308 = vst.msk [vmem:[%s227 + $0x100] sm:$0xff] %vm1275, %v1243
      %1309 = vst.msk [vmem:[%s227 + $0x108] sm:$0xff] %vm1275, %v1244
      %1310 = vst.msk [vmem:[%s227 + $0x110] sm:$0xff] %vm1275, %v1245
      %1311 = vst.msk [vmem:[%s227 + $0x118] sm:$0xff] %vm1275, %v1246
      %1312 = vst.msk [vmem:[%s227 + $0x120] sm:$0xff] %vm1275, %v1247
      %1313 = vst.msk [vmem:[%s227 + $0x128] sm:$0xff] %vm1275, %v1248
      %1314 = vst.msk [vmem:[%s227 + $0x130] sm:$0xff] %vm1275, %v1249
      %1315 = vst.msk [vmem:[%s227 + $0x138] sm:$0xff] %vm1275, %v1250
      %1316 = vst.msk [vmem:[%s227 + $0x140] sm:$0xff] %vm1275, %v1251
      %1317 = vst.msk [vmem:[%s227 + $0x148] sm:$0xff] %vm1275, %v1252
      %1318 = vst.msk [vmem:[%s227 + $0x150] sm:$0xff] %vm1275, %v1253
      %1319 = vst.msk [vmem:[%s227 + $0x158] sm:$0xff] %vm1275, %v1254
      %1320 = vst.msk [vmem:[%s227 + $0x160] sm:$0xff] %vm1275, %v1255
      %1321 = vst.msk [vmem:[%s227 + $0x168] sm:$0xff] %vm1275, %v1256
      %1322 = vst.msk [vmem:[%s227 + $0x170] sm:$0xff] %vm1275, %v1257
      %1323 = vst.msk [vmem:[%s227 + $0x178] sm:$0xff] %vm1275, %v1258
      %1324 = vst.msk [vmem:[%s227 + $0x180] sm:$0xff] %vm1275, %v1259
      %1325 = vst.msk [vmem:[%s227 + $0x188] sm:$0xff] %vm1275, %v1260
      %1326 = vst.msk [vmem:[%s227 + $0x190] sm:$0xff] %vm1275, %v1261
      %1327 = vst.msk [vmem:[%s227 + $0x198] sm:$0xff] %vm1275, %v1262
      %1328 = vst.msk [vmem:[%s227 + $0x1a0] sm:$0xff] %vm1275, %v1263
      %1329 = vst.msk [vmem:[%s227 + $0x1a8] sm:$0xff] %vm1275, %v1264
      %1330 = vst.msk [vmem:[%s227 + $0x1b0] sm:$0xff] %vm1275, %v1265
      %1331 = vst.msk [vmem:[%s227 + $0x1b8] sm:$0xff] %vm1275, %v1266
      %1332 = vst.msk [vmem:[%s227 + $0x1c0] sm:$0xff] %vm1275, %v1267
      %1333 = vst.msk [vmem:[%s227 + $0x1c8] sm:$0xff] %vm1275, %v1268
      %1334 = vst.msk [vmem:[%s227 + $0x1d0] sm:$0xff] %vm1275, %v1269
      %1335 = vst.msk [vmem:[%s227 + $0x1d8] sm:$0xff] %vm1275, %v1270
      %1336 = vst.msk [vmem:[%s227 + $0x1e0] sm:$0xff] %vm1275, %v1271
      %1337 = vst.msk [vmem:[%s227 + $0x1e8] sm:$0xff] %vm1275, %v1272
      %1338 = vst.msk [vmem:[%s227 + $0x1f0] sm:$0xff] %vm1275, %v1273
      %1339 = vst.msk [vmem:[%s227 + $0x1f8] sm:$0xff] %vm1275, %v1274
      %s1340 = smul.u32 64, %s17
      %p1341 = scmp.lt.s32.totalorder %s1340, 191
      %s1342 = scalar_select %p1341, %s1340, 191
      %s1343 = smul.addr %s1342, 8
      %s1344 = scalar_lea.vmem %s5, %s1343
      // Predicated region
      $region41: #{tpu_custom_call.1} parent=39 // pred_check
        %p1345 = pneg %p145
      $region42: #{tpu_custom_call.1} parent=39 // pred_check_branch
        %1347 = sbr.rel (%p1345) target = $region44
      $region43: #{tpu_custom_call.1} parent=39 // pred_region
        %s1348 = smul.u32 64, %s17
      $region44: #{tpu_custom_call.1} parent=39 // pred_fallthru
        _
    $region40: #{tpu_custom_call.1} parent=5 // pred_fallthru
      _
    %p1349 = scmp.le.s32.totalorder 2, %s12
    // Predicated region
    $region45: #{tpu_custom_call.1} parent=5 // pred_check
      %p1350 = pneg %p1349
    $region46: #{tpu_custom_call.1} parent=5 // pred_check_branch
      %1352 = sbr.rel (%p1350) target = $region48
    $region47: #{tpu_custom_call.1} parent=5 // pred_region
      %s1353 = ssub.s32 %s12, 2
      // Predicated region
      $region49: #{tpu_custom_call.1} parent=47 // pred_check
        %p1354 = pneg %p151
      $region50: #{tpu_custom_call.1} parent=47 // pred_check_branch
        %1356 = sbr.rel (%p1354) target = $region52
      $region51: #{tpu_custom_call.1} parent=47 // pred_region
        %s1357 = smul.u32 64, %s18
        %p1358 = scmp.lt.s32.totalorder %s1357, 191
        %s1359 = scalar_select %p1358, %s1357, 191
        %s1360 = smul.addr %s1359, 8
        %s1361 = scalar_lea.vmem %s5, %s1360
      $region52: #{tpu_custom_call.1} parent=47 // pred_fallthru
        _
    $region48: #{tpu_custom_call.1} parent=5 // pred_fallthru
      _
  $region6: #{tpu_custom_call.1} parent=0 // loop_footer
    %s16 = sadd.s32 1, %s12
  $region7: #{tpu_custom_call.1} parent=0 // loop_footer_branch
    %11 = sbr.rel target = $region3
  $region8: #{tpu_custom_call.1} parent=0 // loop_exit
    _

</llo_original>
